<compile_context>
chip_gen: v6e
topology: v6e:2x2x1
jax: 0.10.0
libtpu: 0.0.40
codegen_flags: <defaults>
</compile_context>

<pallas_src>
import functools

import jax
import jax.numpy as jnp
from jax import lax
from jax.experimental import pallas as pl
from jax.experimental.pallas import tpu as pltpu


# ----------------------------------------------------------------------------
# Kernel
# ----------------------------------------------------------------------------
def _siglip_tile_kernel(inv_temp_ref, v_ref, t_ref, row_lse_ref, col_ref,
                        l_row_ref, *, row_acc_width):
    j = pl.program_id(1)
    n_j = pl.num_programs(1)
    inv_temp = inv_temp_ref[0]          # 1/temp; also analytic bound on |logits|

    # Similarity tile on the MXU: bf16 operands, f32 accumulation.  Contracting
    # dim 1 of both operands (v @ t^T) avoids transposing the text tile.
    sim = lax.dot_general(
        v_ref[...], t_ref[...],
        (((1,), (1,)), ((), ())),
        preferred_element_type=jnp.float32)                      # (tm, tn) f32

    # logits = sim * sigmoid(sim) * inv_temp, with |logits| <= inv_temp.
    # One shifted exp feeds BOTH logsumexp paths (no online max / rescale).
    gated = sim * jax.nn.sigmoid(sim)
    e = jnp.exp((gated - 1.0) * inv_temp)                        # exp(logits - inv_temp) <= 1

    tm, tn = e.shape

    # ---- column partials: 8-sublane VALU-only accumulation; lane-dense (8, tn)
    #      block written per grid step, reduced outside the kernel. ----
    col8 = e[0:8, :]
    for k in range(1, tm // 8):                                   # static unroll
        col8 = col8 + e[k * 8:(k + 1) * 8, :]
    col_ref[...] = col8

    # ---- row partials: fold lane groups with VALU adds; keep a (tm, W)
    #      accumulator so the cross-lane (XLU) reduce runs once per row tile. ----
    if row_acc_width > 1:
        row_part = e[:, 0:row_acc_width]
        for k in range(1, tn // row_acc_width):                   # static unroll
            row_part = row_part + e[:, k * row_acc_width:(k + 1) * row_acc_width]
    else:
        row_part = jnp.sum(e, axis=1, keepdims=True)

    @pl.when(j == 0)
    def _():
        l_row_ref[...] = jnp.zeros_like(l_row_ref)

    l_row_ref[...] += row_part

    # ---- row-tile finalize: lse_row = inv_temp + log(sum_c exp(logits - inv_temp)) ----
    @pl.when(j == n_j - 1)
    def _():
        row_tot = l_row_ref[...]
        if row_acc_width > 1:
            row_tot = jnp.sum(row_tot, axis=1, keepdims=True)     # once per row tile
        # Floor guards against underflow if the learned temperature collapses.
        lse_row = inv_temp + jnp.log(jnp.maximum(row_tot, 1e-37))
        row_lse_ref[...] = lse_row                                # (tm, 1)


# ----------------------------------------------------------------------------
# Wrapper
# ----------------------------------------------------------------------------
def _vmem_capacity_bytes():
    try:
        cap = int(pltpu.get_tpu_info().vmem_capacity_bytes)
        if cap > 0:
            return cap
    except Exception:
        pass
    return 64 << 20     # conservative default (v7x per-core VMEM)


def _vmem_need_bytes(bm, bn, d, row_w=128):
    inputs = 2 * (bm + bn) * d * 2            # double-buffered bf16 feature tiles
    outputs = 2 * (bm * 1 + 8 * bn) * 4       # double-buffered f32 output blocks
    scratch = bm * row_w * 4
    temps = 6 * bm * bn * 4                   # sim/gated/e + headroom
    return inputs + outputs + scratch + temps


def _pick_block(batch, d, vmem_cap):
    budget = int(0.7 * vmem_cap)
    for cand in (512, 384, 256, 128):
        if batch % cand == 0 and _vmem_need_bytes(cand, cand, d) <= budget:
            return cand
    return batch        # single tile for small batches. TODO(synk): pad/mask ragged B.


def siglip_loss(video_features, text_features, log_temp=None, *,
                block_m=None, block_n=None):
    """Pallas SIGLIP loss.  video_features, text_features: [B, D].  Returns scalar."""
    B, D = video_features.shape
    assert text_features.shape == (B, D)

    if log_temp is None:
        log_temp = jnp.log(jnp.float32(0.1))
    inv_temp = jnp.exp(-jnp.asarray(log_temp, dtype=jnp.float32))    # 1/temp, scalar

    # ---- hoisted O(B*D) pre-pass: f32 normalize, bf16 cast, diagonal logits ----
    eps_sq = jnp.float32(1e-24)                                      # (1e-12)^2, F.normalize eps
    v32 = video_features.astype(jnp.float32)
    t32 = text_features.astype(jnp.float32)
    vn = v32 * lax.rsqrt(jnp.maximum(jnp.sum(v32 * v32, axis=1, keepdims=True), eps_sq))
    tn = t32 * lax.rsqrt(jnp.maximum(jnp.sum(t32 * t32, axis=1, keepdims=True), eps_sq))
    vn_bf = vn.astype(jnp.bfloat16)
    tn_bf = tn.astype(jnp.bfloat16)
    # Diagonal logits from the same bf16-rounded features the MXU sees.
    diag_sim = jnp.sum(vn_bf.astype(jnp.float32) * tn_bf.astype(jnp.float32), axis=1)
    diag_sum = jnp.sum(diag_sim * jax.nn.sigmoid(diag_sim)) * inv_temp

    # ---- generation-aware tile and VMEM-limit selection ----
    vmem_cap = _vmem_capacity_bytes()
    if block_m is None or block_n is None:
        blk = _pick_block(B, D, vmem_cap)
        block_m = blk if block_m is None else block_m
        block_n = blk if block_n is None else block_n
    assert B % block_m == 0 and B % block_n == 0, "TODO(synk): pad/mask ragged batch sizes"
    assert block_m % 8 == 0
    n_i, n_j = B // block_m, B // block_n
    row_acc_width = 128 if (block_n % 128 == 0) else 1
    need = _vmem_need_bytes(block_m, block_n, D, row_acc_width)
    vmem_limit = int(min(int(0.9 * vmem_cap), max(32 << 20, 2 * need)))

    kernel = functools.partial(_siglip_tile_kernel, row_acc_width=row_acc_width)

    row_lse, col_part = pl.pallas_call(
        kernel,
        out_shape=(
            jax.ShapeDtypeStruct((B, 1), jnp.float32),           # per-row logsumexp
            jax.ShapeDtypeStruct((n_i * 8, B), jnp.float32),     # per-row-tile column partials
        ),
        grid=(n_i, n_j),
        in_specs=[
            pl.BlockSpec(memory_space=pltpu.MemorySpace.SMEM),   # inv_temp (1,)
            pl.BlockSpec((block_m, D), lambda i, j: (i, 0)),     # video rows (bf16)
            pl.BlockSpec((block_n, D), lambda i, j: (j, 0)),     # text rows (bf16)
        ],
        out_specs=(
            pl.BlockSpec((block_m, 1), lambda i, j: (i, 0)),     # resident across j
            pl.BlockSpec((8, block_n), lambda i, j: (i, j)),     # distinct per (i, j)
        ),
        scratch_shapes=[pltpu.VMEM((block_m, row_acc_width), jnp.float32)],
        compiler_params=pltpu.CompilerParams(
            # Row-tile axis is parallel (per-i / per-(i,j) outputs, no shared
            # accumulators) -> megacore can split it on v7x.
            dimension_semantics=("parallel", "arbitrary"),
            vmem_limit_bytes=vmem_limit,
        ),
    )(inv_temp.reshape((1,)), vn_bf, tn_bf)

    # ---- tiny O(B) XLA epilogue ----
    tiny = jnp.float32(1e-37)
    col_sums = jnp.sum(col_part, axis=0)                         # (B,)
    lse_col_sum = jnp.sum(inv_temp + jnp.log(jnp.maximum(col_sums, tiny)))
    lse_row_sum = jnp.sum(row_lse)
    loss = (lse_row_sum + lse_col_sum - 2.0 * diag_sum) * (0.5 / B)
    return loss


# ----------------------------------------------------------------------------
# Pure-JAX references (mirror the PyTorch forward)
# ----------------------------------------------------------------------------
def _siglip_loss_ref(video_features, text_features, log_temp, *, bf16_features=False):
    v = video_features.astype(jnp.float32)
    t = text_features.astype(jnp.float32)
    vn = v * lax.rsqrt(jnp.maximum(jnp.sum(v * v, axis=1, keepdims=True), 1e-24))
    tn = t * lax.rsqrt(jnp.maximum(jnp.sum(t * t, axis=1, keepdims=True), 1e-24))
    if bf16_features:
        # Round the features exactly like the kernel feeds the MXU, so this
        # reference isolates kernel-logic error from deliberate bf16 rounding.
        vn = vn.astype(jnp.bfloat16).astype(jnp.float32)
        tn = tn.astype(jnp.bfloat16).astype(jnp.float32)
    sim = jnp.matmul(vn, tn.T, precision=lax.Precision.HIGHEST)
    gated = sim * jax.nn.sigmoid(sim)
    logits = gated / jnp.exp(jnp.asarray(log_temp, jnp.float32))
    lse_row = jax.nn.logsumexp(logits, axis=1)
    lse_col = jax.nn.logsumexp(logits, axis=0)
    diag = jnp.diagonal(logits)
    return 0.5 * (jnp.mean(lse_row - diag) + jnp.mean(lse_col - diag))


# ----------------------------------------------------------------------------
# Self-test
# ----------------------------------------------------------------------------
if __name__ == "__main__":
    log_temp = jnp.log(jnp.float32(0.1))

    # Main shapes: exercise a 2x2 grid with proper (8,128)-aligned tiles.
    B, D = 256, 64
    kv, kt = jax.random.split(jax.random.PRNGKey(0))
    video = jax.random.normal(kv, (B, D), dtype=jnp.float32)
    text = jax.random.normal(kt, (B, D), dtype=jnp.float32)

    ref_f32 = _siglip_loss_ref(video, text, log_temp)
    ref_bf16 = _siglip_loss_ref(video, text, log_temp, bf16_features=True)

    # Explicit 128x128 tiles -> 2x2 grid (multi-tile row/column paths).
    loss_tiled = jax.block_until_ready(
        siglip_loss(video, text, log_temp, block_m=128, block_n=128))
    # Auto-picked (generation-aware) tiles.
    loss_auto = jax.block_until_ready(siglip_loss(video, text, log_temp))

    for loss in (loss_tiled, loss_auto):
        assert bool(jnp.isfinite(loss)), loss
        # Tight check vs the bf16-feature-matched reference (isolates kernel logic).
        assert jnp.allclose(loss, ref_bf16, atol=5e-3, rtol=1e-3), (loss, ref_bf16)
        # Loosened check vs the pure-f32 reference (deliberate bf16-MXU rounding).
        assert jnp.allclose(loss, ref_f32, atol=5e-2, rtol=1e-2), (loss, ref_f32)

    # Tiny single-tile path (blocks == full dims, narrow-lane fallback reduce).
    Bs, Ds = 16, 32
    kv2, kt2 = jax.random.split(jax.random.PRNGKey(1))
    video_s = jax.random.normal(kv2, (Bs, Ds), dtype=jnp.float32)
    text_s = jax.random.normal(kt2, (Bs, Ds), dtype=jnp.float32)
    loss_s = jax.block_until_ready(siglip_loss(video_s, text_s, log_temp))
    ref_s = _siglip_loss_ref(video_s, text_s, log_temp)
    assert jnp.allclose(loss_s, ref_s, atol=5e-2, rtol=1e-2), (loss_s, ref_s)

    print("KERNEL_OK")
</pallas_src>

<mosaic_0001>
module attributes {stable_mosaic.version = 11 : i64} {
  func.func @_siglip_tile_kernel(%arg0: i32, %arg1: i32, %arg2: memref<1xf32, #tpu.memory_space<smem>>, %arg3: memref<128x64xbf16, #tpu.memory_space<vmem>>, %arg4: memref<128x64xbf16, #tpu.memory_space<vmem>>, %arg5: memref<128x1xf32, #tpu.memory_space<vmem>>, %arg6: memref<8x128xf32, #tpu.memory_space<vmem>>, %arg7: memref<128x128xf32, #tpu.memory_space<vmem>>) attributes {dimension_semantics = [#tpu.dimension_semantics<parallel>, #tpu.dimension_semantics<arbitrary>], iteration_bounds = array<i64: 2, 2>, scalar_prefetch = 0 : i64, scratch_operands = 1 : i64, tpu.core_type = #tpu.core_type<tc>, window_params = [{transform_indices = @transform_0, window_bounds = array<i64: 1>}, {transform_indices = @transform_1, window_bounds = array<i64: 128, 64>}, {transform_indices = @transform_2, window_bounds = array<i64: 128, 64>}, {transform_indices = @transform_3, window_bounds = array<i64: 128, 1>}, {transform_indices = @transform_4, window_bounds = array<i64: 8, 128>}]} {
    %c0 = arith.constant 0 : index
    %0 = memref.load %arg2[%c0] : memref<1xf32, #tpu.memory_space<smem>>
    %c0_0 = arith.constant 0 : index
    %c0_1 = arith.constant 0 : index
    %1 = vector.load %arg3[%c0_0, %c0_1] : memref<128x64xbf16, #tpu.memory_space<vmem>>, vector<128x64xbf16>
    %c0_2 = arith.constant 0 : index
    %c0_3 = arith.constant 0 : index
    %2 = vector.load %arg4[%c0_2, %c0_3] : memref<128x64xbf16, #tpu.memory_space<vmem>>, vector<128x64xbf16>
    %cst = arith.constant dense<0.000000e+00> : vector<128x128xf32>
    %3 = tpu.matmul %1, %2, %cst {dimension_numbers = #tpu.dot_dimension_numbers<[1], [1], [0], [0], [0, 0, 1, 0], [], []>} : vector<128x64xbf16>, vector<128x64xbf16>, vector<128x128xf32> -> vector<128x128xf32>
    %4 = arith.negf %3 : vector<128x128xf32>
    %5 = math.exp %4 : vector<128x128xf32>
    %cst_4 = arith.constant 1.000000e+00 : f32
    %6 = vector.broadcast %cst_4 : f32 to vector<128x128xf32>
    %7 = arith.addf %6, %5 : vector<128x128xf32>
    %8 = arith.divf %6, %7 : vector<128x128xf32>
    %9 = arith.mulf %3, %8 : vector<128x128xf32>
    %cst_5 = arith.constant 1.000000e+00 : f32
    %10 = vector.broadcast %cst_5 : f32 to vector<128x128xf32>
    %11 = arith.subf %9, %10 : vector<128x128xf32>
    %12 = vector.broadcast %0 : f32 to vector<128x128xf32>
    %13 = arith.mulf %11, %12 : vector<128x128xf32>
    %14 = math.exp %13 : vector<128x128xf32>
    %15 = vector.extract_strided_slice %14 {offsets = [0, 0], sizes = [8, 128], strides = [1, 1]} : vector<128x128xf32> to vector<8x128xf32>
    %16 = vector.extract_strided_slice %14 {offsets = [8, 0], sizes = [8, 128], strides = [1, 1]} : vector<128x128xf32> to vector<8x128xf32>
    %17 = arith.addf %15, %16 : vector<8x128xf32>
    %18 = vector.extract_strided_slice %14 {offsets = [16, 0], sizes = [8, 128], strides = [1, 1]} : vector<128x128xf32> to vector<8x128xf32>
    %19 = arith.addf %17, %18 : vector<8x128xf32>
    %20 = vector.extract_strided_slice %14 {offsets = [24, 0], sizes = [8, 128], strides = [1, 1]} : vector<128x128xf32> to vector<8x128xf32>
    %21 = arith.addf %19, %20 : vector<8x128xf32>
    %22 = vector.extract_strided_slice %14 {offsets = [32, 0], sizes = [8, 128], strides = [1, 1]} : vector<128x128xf32> to vector<8x128xf32>
    %23 = arith.addf %21, %22 : vector<8x128xf32>
    %24 = vector.extract_strided_slice %14 {offsets = [40, 0], sizes = [8, 128], strides = [1, 1]} : vector<128x128xf32> to vector<8x128xf32>
    %25 = arith.addf %23, %24 : vector<8x128xf32>
    %26 = vector.extract_strided_slice %14 {offsets = [48, 0], sizes = [8, 128], strides = [1, 1]} : vector<128x128xf32> to vector<8x128xf32>
    %27 = arith.addf %25, %26 : vector<8x128xf32>
    %28 = vector.extract_strided_slice %14 {offsets = [56, 0], sizes = [8, 128], strides = [1, 1]} : vector<128x128xf32> to vector<8x128xf32>
    %29 = arith.addf %27, %28 : vector<8x128xf32>
    %30 = vector.extract_strided_slice %14 {offsets = [64, 0], sizes = [8, 128], strides = [1, 1]} : vector<128x128xf32> to vector<8x128xf32>
    %31 = arith.addf %29, %30 : vector<8x128xf32>
    %32 = vector.extract_strided_slice %14 {offsets = [72, 0], sizes = [8, 128], strides = [1, 1]} : vector<128x128xf32> to vector<8x128xf32>
    %33 = arith.addf %31, %32 : vector<8x128xf32>
    %34 = vector.extract_strided_slice %14 {offsets = [80, 0], sizes = [8, 128], strides = [1, 1]} : vector<128x128xf32> to vector<8x128xf32>
    %35 = arith.addf %33, %34 : vector<8x128xf32>
    %36 = vector.extract_strided_slice %14 {offsets = [88, 0], sizes = [8, 128], strides = [1, 1]} : vector<128x128xf32> to vector<8x128xf32>
    %37 = arith.addf %35, %36 : vector<8x128xf32>
    %38 = vector.extract_strided_slice %14 {offsets = [96, 0], sizes = [8, 128], strides = [1, 1]} : vector<128x128xf32> to vector<8x128xf32>
    %39 = arith.addf %37, %38 : vector<8x128xf32>
    %40 = vector.extract_strided_slice %14 {offsets = [104, 0], sizes = [8, 128], strides = [1, 1]} : vector<128x128xf32> to vector<8x128xf32>
    %41 = arith.addf %39, %40 : vector<8x128xf32>
    %42 = vector.extract_strided_slice %14 {offsets = [112, 0], sizes = [8, 128], strides = [1, 1]} : vector<128x128xf32> to vector<8x128xf32>
    %43 = arith.addf %41, %42 : vector<8x128xf32>
    %44 = vector.extract_strided_slice %14 {offsets = [120, 0], sizes = [8, 128], strides = [1, 1]} : vector<128x128xf32> to vector<8x128xf32>
    %45 = arith.addf %43, %44 : vector<8x128xf32>
    %c0_6 = arith.constant 0 : index
    %c0_7 = arith.constant 0 : index
    %46 = vector.load %arg6[%c0_6, %c0_7] : memref<8x128xf32, #tpu.memory_space<vmem>>, vector<8x128xf32>
    tpu.vector_store %arg6[%c0_6, %c0_7], %45 {strides = array<i32>} : memref<8x128xf32, #tpu.memory_space<vmem>>, vector<8x128xf32>,
    %c0_i32 = arith.constant 0 : i32
    %47 = arith.cmpi eq, %arg1, %c0_i32 : i32
    %48 = arith.extui %47 : i1 to i32
    %c0_i32_8 = arith.constant 0 : i32
    %49 = arith.cmpi ne, %48, %c0_i32_8 : i32
    scf.if %49 {
      %cst_14 = arith.constant 0.000000e+00 : f32
      %56 = vector.broadcast %cst_14 : f32 to vector<128x128xf32>
      %c0_15 = arith.constant 0 : index
      %c0_16 = arith.constant 0 : index
      %57 = vector.load %arg7[%c0_15, %c0_16] : memref<128x128xf32, #tpu.memory_space<vmem>>, vector<128x128xf32>
      tpu.vector_store %arg7[%c0_15, %c0_16], %56 {strides = array<i32>} : memref<128x128xf32, #tpu.memory_space<vmem>>, vector<128x128xf32>,
    } else {
    }
    %c0_9 = arith.constant 0 : index
    %c0_10 = arith.constant 0 : index
    %50 = vector.load %arg7[%c0_9, %c0_10] : memref<128x128xf32, #tpu.memory_space<vmem>>, vector<128x128xf32>
    %51 = arith.addf %50, %14 : vector<128x128xf32>
    %c0_11 = arith.constant 0 : index
    %c0_12 = arith.constant 0 : index
    %52 = vector.load %arg7[%c0_11, %c0_12] : memref<128x128xf32, #tpu.memory_space<vmem>>, vector<128x128xf32>
    tpu.vector_store %arg7[%c0_11, %c0_12], %51 {strides = array<i32>} : memref<128x128xf32, #tpu.memory_space<vmem>>, vector<128x128xf32>,
    %c1_i32 = arith.constant 1 : i32
    %53 = arith.cmpi eq, %arg1, %c1_i32 : i32
    %54 = arith.extui %53 : i1 to i32
    %c0_i32_13 = arith.constant 0 : i32
    %55 = arith.cmpi ne, %54, %c0_i32_13 : i32
    scf.if %55 {
      %c0_14 = arith.constant 0 : index
      %c0_15 = arith.constant 0 : index
      %56 = vector.load %arg7[%c0_14, %c0_15] : memref<128x128xf32, #tpu.memory_space<vmem>>, vector<128x128xf32>
      %cst_16 = arith.constant dense<0.000000e+00> : vector<128xf32>
      %57 = vector.multi_reduction <add>, %56, %cst_16 [1] : vector<128x128xf32> to vector<128xf32>
      %58 = vector.shape_cast %57 : vector<128xf32> to vector<128x1xf32>
      %cst_17 = arith.constant 9.99999991E-38 : f32
      %59 = vector.broadcast %cst_17 : f32 to vector<128x1xf32>
      %60 = arith.maximumf %58, %59 : vector<128x1xf32>
      %61 = math.log %60 : vector<128x1xf32>
      %62 = vector.broadcast %0 : f32 to vector<128x1xf32>
      %63 = arith.addf %62, %61 : vector<128x1xf32>
      %c0_18 = arith.constant 0 : index
      %c0_19 = arith.constant 0 : index
      %64 = vector.load %arg5[%c0_18, %c0_19] : memref<128x1xf32, #tpu.memory_space<vmem>>, vector<128x1xf32>
      tpu.vector_store %arg5[%c0_18, %c0_19], %63 {strides = array<i32>} : memref<128x1xf32, #tpu.memory_space<vmem>>, vector<128x1xf32>,
    } else {
    }
    return
  }
  func.func @transform_0(%arg0: i32, %arg1: i32) -> i32 {
    %c0_i32 = arith.constant 0 : i32
    %c0_i32_0 = arith.constant 0 : i32
    return %c0_i32 : i32
  }
  func.func @transform_1(%arg0: i32, %arg1: i32) -> (i32, i32) {
    %c0_i32 = arith.constant 0 : i32
    %c0_i32_0 = arith.constant 0 : i32
    return %arg0, %c0_i32 : i32, i32
  }
  func.func @transform_2(%arg0: i32, %arg1: i32) -> (i32, i32) {
    %c0_i32 = arith.constant 0 : i32
    %c0_i32_0 = arith.constant 0 : i32
    return %arg1, %c0_i32 : i32, i32
  }
  func.func @transform_3(%arg0: i32, %arg1: i32) -> (i32, i32) {
    %c0_i32 = arith.constant 0 : i32
    %c0_i32_0 = arith.constant 0 : i32
    return %arg0, %c0_i32 : i32, i32
  }
  func.func @transform_4(%arg0: i32, %arg1: i32) -> (i32, i32) {
    %c0_i32 = arith.constant 0 : i32
    return %arg0, %arg1 : i32, i32
  }
}

</mosaic_0001>

<llo_original>
// kernel: tpu_custom_call.1
$region0: #{tpu_custom_call.1}
  #allocation0 [shape = 'u32[]', space=smem, size = 0x4, offset = 0x4, fixed_abs, tag = 'smem constant byte address 0x4 - core index']
  #allocation1 [shape = 'u32[144,128]{1,0:T(1,128)}', space=vmem, size = 0x12000, scoped, tag = 'internal scratch']
  #allocation2 [shape = 'f32[128,128]{1,0:T(8,128)}', space=vmem, size = 0x10000, scoped, tag = 'scratch operand']
  #allocation3 [shape = 'f32[1]{0:T(128)S(6)}', space=smem, size = 0x200, scoped, tag = 'scoped memory for tpu_custom_call.1']
  %s0 = inlined_call_operand.<no memory space> [shape: f32[1], index: 0, kind: input, shape index: {}]
  %s1 = inlined_call_operand.vmem [shape: bf16[256,64], index: 1, kind: input, shape index: {}]
  %s2 = inlined_call_operand.vmem [shape: bf16[256,64], index: 2, kind: input, shape index: {}]
  %s3 = inlined_call_operand.vmem [shape: f32[256,1], index: 3, kind: output, shape index: {0}]
  %s4 = inlined_call_operand.hbm [shape: f32[16,256], index: 4, kind: output, shape index: {1}]
  %5 = xla_tuple %s3, %s4
  %s6 = sld [smem:[#allocation0]]
  $region61: #{tpu_custom_call.1} parent=0
    _
  %s8 = ssub.s32 1, %s6
  %s9 = scalar_select 0, %s8, %s6
  %10 = sst [smem:[#allocation3]] %s0
  $region1: #{tpu_custom_call.1} parent=0
    #allocation4 [shape = 'u8[8192]{0}', space=vmem, size = 0x2000, scoped, tag = 'output window, operand 1']
    #allocation5 [shape = 's32[2]{0}', space=sflag, size = 0x8, scoped, tag = 'scoped memory for tpu_custom_call.1']
    %11 = vsyncpa [#allocation5], 0
    %s12 = scalar_lea.sflag [#allocation5], 1
    %13 = vsyncpa %s12, 0
    loop: start=0, step=1, limit=6
    $region2: #{tpu_custom_call.1} parent=1 // loop_pre_header
      _
    $region3: #{tpu_custom_call.1} parent=1 // loop_header
      %s15 = sphi 0, %s19
      %p16 = scmp.ge.s32.totalorder %s15, 6
      %s22 = sphi 0, %s34
      %s23 = sphi 0, %s30
      %s24 = sphi 0, %s22
      %s25 = sphi 0, %s23
      %s26 = sphi 0, %s24
      %s27 = sphi 0, %s25
      %s35 = sphi 0, %s35
      %s37 = sphi 0, %s35
      %s38 = sphi 0, %s37
      %s52 = sphi 0, %s38
      %s58 = sphi 0, %s60
      %s61 = sphi 0, %s58
      %s62 = sphi 0, %s61
      %s78 = sphi 0, %s62
      %s84 = sphi 0, %s86
      %s87 = sphi 0, %s84
      %s88 = sphi 0, %s87
      %s104 = sphi 0, %s88
      %s110 = sphi 0, %s112
      %s113 = sphi 0, %s110
      %s114 = sphi 0, %s113
      %s130 = sphi 0, %s114
      %s138 = sphi 0, %s140
      %s141 = sphi 0, %s138
      %s142 = sphi 0, %s141
      %s158 = sphi 0, %s142
    $region4: #{tpu_custom_call.1} parent=1 // loop_header_branch
      %18 = sbr.rel (%p16) target = $region8
    $region5: #{tpu_custom_call.1} parent=1 // loop_body
      %s20 = ssub.s32 %s15, 1
      %s21 = ssub.s32 %s15, 2
      %s28 = sadd.s32 1, %s23
      %p29 = scmp.ge.s32.totalorder %s28, 2
      %s30 = scalar_select %p29, 0, %s28
      %s31 = sadd.s32 1, %s22
      %s32 = scalar_select %p29, %s31, %s22
      %p33 = scmp.ge.s32.totalorder %s32, 2
      %s34 = scalar_select %p33, 0, %s32
      %s36 = sadd.s32 %s35, 1
      %p39 = scmp.eq.s32.totalorder %s15, 3
      %p40 = scmp.ne.s32.totalorder %s35, %s37
      %p41 = scmp.eq.s32.totalorder %s15, 0
      %p42 = por %p40, %p41
      %p43 = scmp.ne.s32.totalorder %s35, %s37
      %p44 = scmp.eq.s32.totalorder %s20, 3
      %p45 = por %p43, %p44
      %p46 = scmp.ne.s32.totalorder %s37, %s38
      %p47 = scmp.eq.s32.totalorder %s20, 0
      %p48 = por %p46, %p47
      %p49 = scmp.ne.s32.totalorder %s37, %s38
      %p50 = scmp.eq.s32.totalorder %s21, 3
      %p51 = por %p49, %p50
      %p53 = scmp.ne.s32.totalorder %s38, %s52
      %p54 = scmp.eq.s32.totalorder %s21, 0
      %p55 = por %p53, %p54
      %s56 = ssub.s32 %s22, %s34
      %p57 = scmp.eq.s32.totalorder %s56, 0
      %s59 = sadd.s32 %s58, 1
      %s60 = scalar_select %p57, %s58, %s59
      %p63 = pneg %p57
      %p64 = scmp.eq.s32.totalorder %s15, 3
      %p65 = por %p63, %p64
      %p66 = scmp.ne.s32.totalorder %s58, %s61
      %p67 = scmp.eq.s32.totalorder %s15, 0
      %p68 = por %p66, %p67
      %p69 = scmp.ne.s32.totalorder %s58, %s61
      %p70 = scmp.eq.s32.totalorder %s20, 3
      %p71 = por %p69, %p70
      %p72 = scmp.ne.s32.totalorder %s61, %s62
      %p73 = scmp.eq.s32.totalorder %s20, 0
      %p74 = por %p72, %p73
      %p75 = scmp.ne.s32.totalorder %s61, %s62
      %p76 = scmp.eq.s32.totalorder %s21, 3
      %p77 = por %p75, %p76
      %p79 = scmp.ne.s32.totalorder %s62, %s78
      %p80 = scmp.eq.s32.totalorder %s21, 0
      %p81 = por %p79, %p80
      %s82 = ssub.s32 %s23, %s30
      %p83 = scmp.eq.s32.totalorder %s82, 0
      %s85 = sadd.s32 %s84, 1
      %s86 = scalar_select %p83, %s84, %s85
      %p89 = pneg %p83
      %p90 = scmp.eq.s32.totalorder %s15, 3
      %p91 = por %p89, %p90
      %p92 = scmp.ne.s32.totalorder %s84, %s87
      %p93 = scmp.eq.s32.totalorder %s15, 0
      %p94 = por %p92, %p93
      %p95 = scmp.ne.s32.totalorder %s84, %s87
      %p96 = scmp.eq.s32.totalorder %s20, 3
      %p97 = por %p95, %p96
      %p98 = scmp.ne.s32.totalorder %s87, %s88
      %p99 = scmp.eq.s32.totalorder %s20, 0
      %p100 = por %p98, %p99
      %p101 = scmp.ne.s32.totalorder %s87, %s88
      %p102 = scmp.eq.s32.totalorder %s21, 3
      %p103 = por %p101, %p102
      %p105 = scmp.ne.s32.totalorder %s88, %s104
      %p106 = scmp.eq.s32.totalorder %s21, 0
      %p107 = por %p105, %p106
      %s108 = ssub.s32 %s22, %s34
      %p109 = scmp.eq.s32.totalorder %s108, 0
      %s111 = sadd.s32 %s110, 1
      %s112 = scalar_select %p109, %s110, %s111
      %p115 = pneg %p109
      %p116 = scmp.eq.s32.totalorder %s15, 3
      %p117 = por %p115, %p116
      %p118 = scmp.ne.s32.totalorder %s110, %s113
      %p119 = scmp.eq.s32.totalorder %s15, 0
      %p120 = por %p118, %p119
      %p121 = scmp.ne.s32.totalorder %s110, %s113
      %p122 = scmp.eq.s32.totalorder %s20, 3
      %p123 = por %p121, %p122
      %p124 = scmp.ne.s32.totalorder %s113, %s114
      %p125 = scmp.eq.s32.totalorder %s20, 0
      %p126 = por %p124, %p125
      %p127 = scmp.ne.s32.totalorder %s113, %s114
      %p128 = scmp.eq.s32.totalorder %s21, 3
      %p129 = por %p127, %p128
      %p131 = scmp.ne.s32.totalorder %s114, %s130
      %p132 = scmp.eq.s32.totalorder %s21, 0
      %p133 = por %p131, %p132
      %s134 = ssub.s32 %s22, %s34
      %s135 = ssub.s32 %s23, %s30
      %s136 = sor.u32 %s134, %s135
      %p137 = scmp.eq.s32.totalorder %s136, 0
      %s139 = sadd.s32 %s138, 1
      %s140 = scalar_select %p137, %s138, %s139
      %p143 = pneg %p137
      %p144 = scmp.eq.s32.totalorder %s15, 3
      %p145 = por %p143, %p144
      %p146 = scmp.ne.s32.totalorder %s138, %s141
      %p147 = scmp.eq.s32.totalorder %s15, 0
      %p148 = por %p146, %p147
      %p149 = scmp.ne.s32.totalorder %s138, %s141
      %p150 = scmp.eq.s32.totalorder %s20, 3
      %p151 = por %p149, %p150
      %p152 = scmp.ne.s32.totalorder %s141, %s142
      %p153 = scmp.eq.s32.totalorder %s20, 0
      %p154 = por %p152, %p153
      %p155 = scmp.ne.s32.totalorder %s141, %s142
      %p156 = scmp.eq.s32.totalorder %s21, 3
      %p157 = por %p155, %p156
      %p159 = scmp.ne.s32.totalorder %s142, %s158
      %p160 = scmp.eq.s32.totalorder %s21, 0
      %p161 = por %p159, %p160
      %p162 = scmp.le.s32.totalorder 1, %s15
      %p163 = scmp.lt.s32.totalorder %s15, 5
      %p164 = pnand %p162, %p163
      %p165 = pneg %p164
      // Predicated region
      $region9: #{tpu_custom_call.1} parent=5 // pred_check
        _
      $region10: #{tpu_custom_call.1} parent=5 // pred_check_branch
        %167 = sbr.rel (%p164) target = $region12
      $region11: #{tpu_custom_call.1} parent=5 // pred_region
        %s168 = ssub.s32 %s15, 1
        // Predicated region
        $region13: #{tpu_custom_call.1} parent=11 // pred_check
          %p169 = pneg %p48
        $region14: #{tpu_custom_call.1} parent=11 // pred_check_branch
          %171 = sbr.rel (%p169) target = $region16
        $region15: #{tpu_custom_call.1} parent=11 // pred_region
          _
        $region16: #{tpu_custom_call.1} parent=11 // pred_fallthru
          _
      $region12: #{tpu_custom_call.1} parent=5 // pred_fallthru
        _
      %p172 = scmp.lt.s32.totalorder %s15, 4
      // Predicated region
      $region17: #{tpu_custom_call.1} parent=5 // pred_check
        %p173 = pneg %p172
      $region18: #{tpu_custom_call.1} parent=5 // pred_check_branch
        %175 = sbr.rel (%p173) target = $region20
      $region19: #{tpu_custom_call.1} parent=5 // pred_region
        // Predicated region
        $region21: #{tpu_custom_call.1} parent=19 // pred_check
          %p176 = pneg %p68
        $region22: #{tpu_custom_call.1} parent=19 // pred_check_branch
          %178 = sbr.rel (%p176) target = $region24
        $region23: #{tpu_custom_call.1} parent=19 // pred_region
          %s179 = smul.u32 16, %s22
          %p180 = scmp.lt.s32.totalorder %s179, 31
          %s181 = scalar_select %p180, %s179, 31
          %s182 = smul.addr %s181, 4
          %s183 = scalar_lea.vmem %s1, %s182
          %s184 = smul.u32 16, %s22
        $region24: #{tpu_custom_call.1} parent=19 // pred_fallthru
          _
        // Predicated region
        $region25: #{tpu_custom_call.1} parent=19 // pred_check
          %p185 = pneg %p94
        $region26: #{tpu_custom_call.1} parent=19 // pred_check_branch
          %187 = sbr.rel (%p185) target = $region28
        $region27: #{tpu_custom_call.1} parent=19 // pred_region
          %s188 = smul.u32 16, %s23
          %p189 = scmp.lt.s32.totalorder %s188, 31
          %s190 = scalar_select %p189, %s188, 31
          %s191 = smul.addr %s190, 4
          %s192 = scalar_lea.vmem %s2, %s191
          %s193 = smul.u32 16, %s23
        $region28: #{tpu_custom_call.1} parent=19 // pred_fallthru
          _
      $region20: #{tpu_custom_call.1} parent=5 // pred_fallthru
        _
      %p194 = scmp.le.s32.totalorder 1, %s15
      %p195 = scmp.lt.s32.totalorder %s15, 5
      %p196 = pnand %p194, %p195
      %p197 = pneg %p196
      // Predicated region
      $region29: #{tpu_custom_call.1} parent=5 // pred_check
        _
      $region30: #{tpu_custom_call.1} parent=5 // pred_check_branch
        %199 = sbr.rel (%p196) target = $region32
      $region31: #{tpu_custom_call.1} parent=5 // pred_region
        %s200 = ssub.s32 %s15, 1
        %p201 = pneg %p48
        %p202 = pneg %p45
        %s203 = smul.u32 16, %s24
        %p204 = scmp.lt.s32.totalorder %s203, 31
        %s205 = scalar_select %p204, %s203, 31
        %s206 = smul.addr %s205, 4
        %s207 = scalar_lea.vmem %s1, %s206
        %p208 = pneg %p74
        %p209 = pneg %p71
        %s210 = smul.u32 16, %s25
        %p211 = scmp.lt.s32.totalorder %s210, 31
        %s212 = scalar_select %p211, %s210, 31
        %s213 = smul.addr %s212, 4
        %s214 = scalar_lea.vmem %s2, %s213
        %p215 = pneg %p100
        %p216 = pneg %p97
        %p217 = pneg %p126
        %p218 = pneg %p123
        %s219 = smul.u32 16, %s24
        %p220 = scmp.lt.s32.totalorder %s219, 31
        %s221 = scalar_select %p220, %s219, 31
        %s222 = smul.addr %s221, 8
        %s223 = scalar_lea.vmem %s3, %s222
        %p224 = pneg %p154
        %p225 = pneg %p151
        %s226 = sand.u32 %s141, 1
        %s227 = scalar_lea.sflag [#allocation5], %s226
        %s228 = sand.u32 %s141, 1
        %s229 = smul.addr %s228, 8
        %s230 = scalar_lea.vmem [#allocation4], %s229
        %s231 = smul.u32 16, %s24
        %p232 = scmp.lt.s32.totalorder %s231, 31
        %s233 = scalar_select %p232, %s231, 31
        %s234 = smul.addr %s233, 4
        %s235 = scalar_lea.vmem %s1, %s234
        %s236 = smul.u32 16, %s24
        %s237 = smul.u32 16, %s25
        %p238 = scmp.lt.s32.totalorder %s237, 31
        %s239 = scalar_select %p238, %s237, 31
        %s240 = smul.addr %s239, 4
        %s241 = scalar_lea.vmem %s2, %s240
        %s242 = smul.u32 16, %s25
        %s243 = smul.u32 16, %s24
        %p244 = scmp.lt.s32.totalorder %s243, 31
        %s245 = scalar_select %p244, %s243, 31
        %s246 = smul.addr %s245, 8
        %s247 = scalar_lea.vmem %s3, %s246
        %s248 = smul.u32 16, %s24
        %s250 = sld [smem:[#allocation3]]
        %v251 = vld [vmem:[%s235] sm:$0xf]
        %v252 = vld [vmem:[%s235 + $0x4] sm:$0xf]
        %v253 = vld [vmem:[%s235 + $0x8] sm:$0xf]
        %v254 = vld [vmem:[%s235 + $0xc] sm:$0xf]
        %v255 = vld [vmem:[%s235 + $0x10] sm:$0xf]
        %v256 = vld [vmem:[%s235 + $0x14] sm:$0xf]
        %v257 = vld [vmem:[%s235 + $0x18] sm:$0xf]
        %v258 = vld [vmem:[%s235 + $0x1c] sm:$0xf]
        %v259 = vld [vmem:[%s235 + $0x20] sm:$0xf]
        %v260 = vld [vmem:[%s235 + $0x24] sm:$0xf]
        %v261 = vld [vmem:[%s235 + $0x28] sm:$0xf]
        %v262 = vld [vmem:[%s235 + $0x2c] sm:$0xf]
        %v263 = vld [vmem:[%s235 + $0x30] sm:$0xf]
        %v264 = vld [vmem:[%s235 + $0x34] sm:$0xf]
        %v265 = vld [vmem:[%s235 + $0x38] sm:$0xf]
        %v266 = vld [vmem:[%s235 + $0x3c] sm:$0xf]
        %v267 = vld [vmem:[%s241] sm:$0xf]
        %v268 = vld [vmem:[%s241 + $0x4] sm:$0xf]
        %v269 = vld [vmem:[%s241 + $0x8] sm:$0xf]
        %v270 = vld [vmem:[%s241 + $0xc] sm:$0xf]
        %v271 = vld [vmem:[%s241 + $0x10] sm:$0xf]
        %v272 = vld [vmem:[%s241 + $0x14] sm:$0xf]
        %v273 = vld [vmem:[%s241 + $0x18] sm:$0xf]
        %v274 = vld [vmem:[%s241 + $0x1c] sm:$0xf]
        %v275 = vld [vmem:[%s241 + $0x20] sm:$0xf]
        %v276 = vld [vmem:[%s241 + $0x24] sm:$0xf]
        %v277 = vld [vmem:[%s241 + $0x28] sm:$0xf]
        %v278 = vld [vmem:[%s241 + $0x2c] sm:$0xf]
        %v279 = vld [vmem:[%s241 + $0x30] sm:$0xf]
        %v280 = vld [vmem:[%s241 + $0x34] sm:$0xf]
        %v281 = vld [vmem:[%s241 + $0x38] sm:$0xf]
        %v282 = vld [vmem:[%s241 + $0x3c] sm:$0xf]
        %v299 = vunpack.c.l.b16 %v251
        %v300 = vunpack.c.l.b16 %v252
        %v301 = vunpack.c.l.b16 %v253
        %v302 = vunpack.c.l.b16 %v254
        %v303 = vunpack.c.l.b16 %v255
        %v304 = vunpack.c.l.b16 %v256
        %v305 = vunpack.c.l.b16 %v257
        %v306 = vunpack.c.l.b16 %v258
        %v307 = vunpack.c.l.b16 %v259
        %v308 = vunpack.c.l.b16 %v260
        %v309 = vunpack.c.l.b16 %v261
        %v310 = vunpack.c.l.b16 %v262
        %v311 = vunpack.c.l.b16 %v263
        %v312 = vunpack.c.l.b16 %v264
        %v313 = vunpack.c.l.b16 %v265
        %v314 = vunpack.c.l.b16 %v266
        %v315 = vpack.c.b16 %v300, %v299
        %v316 = vpack.c.b16 %v302, %v301
        %v317 = vpack.c.b16 %v304, %v303
        %v318 = vpack.c.b16 %v306, %v305
        %v319 = vpack.c.b16 %v308, %v307
        %v320 = vpack.c.b16 %v310, %v309
        %v321 = vpack.c.b16 %v312, %v311
        %v322 = vpack.c.b16 %v314, %v313
        %v339 = vunpack.c.l.b16 %v267
        %v340 = vunpack.c.l.b16 %v268
        %v341 = vunpack.c.l.b16 %v269
        %v342 = vunpack.c.l.b16 %v270
        %v343 = vunpack.c.l.b16 %v271
        %v344 = vunpack.c.l.b16 %v272
        %v345 = vunpack.c.l.b16 %v273
        %v346 = vunpack.c.l.b16 %v274
        %v347 = vunpack.c.l.b16 %v275
        %v348 = vunpack.c.l.b16 %v276
        %v349 = vunpack.c.l.b16 %v277
        %v350 = vunpack.c.l.b16 %v278
        %v351 = vunpack.c.l.b16 %v279
        %v352 = vunpack.c.l.b16 %v280
        %v353 = vunpack.c.l.b16 %v281
        %v354 = vunpack.c.l.b16 %v282
        %v355 = vpack.c.b16 %v340, %v339
        %v356 = vpack.c.b16 %v342, %v341
        %v357 = vpack.c.b16 %v344, %v343
        %v358 = vpack.c.b16 %v346, %v345
        %v359 = vpack.c.b16 %v348, %v347
        %v360 = vpack.c.b16 %v350, %v349
        %v361 = vpack.c.b16 %v352, %v351
        %v362 = vpack.c.b16 %v354, %v353
        %vm363 = vcmask 523264
        %v365 = vsel %vm363, %v315, 0
        %v368 = vsel %vm363, %v316, 0
        %v371 = vsel %vm363, %v317, 0
        %v374 = vsel %vm363, %v318, 0
        %v377 = vsel %vm363, %v319, 0
        %v380 = vsel %vm363, %v320, 0
        %v383 = vsel %vm363, %v321, 0
        %v386 = vsel %vm363, %v322, 0
        %v389 = vsel %vm363, %v355, 0
        %v392 = vsel %vm363, %v356, 0
        %v395 = vsel %vm363, %v357, 0
        %v398 = vsel %vm363, %v358, 0
        %v401 = vsel %vm363, %v359, 0
        %v404 = vsel %vm363, %v360, 0
        %v407 = vsel %vm363, %v361, 0
        %v410 = vsel %vm363, %v362, 0
        %412 = vmatprep.subr.bf16.mxu0 0
        %413 = vmatpush1.bf16.xpose.msra.mxu0 %v410
        %414 = vmatprep.subr.bf16.mxu0 0
        %415 = vmatpush1.bf16.xpose.msra.mxu0 %v407
        %416 = vmatprep.subr.bf16.mxu0 0
        %417 = vmatpush1.bf16.xpose.msra.mxu0 %v404
        %418 = vmatprep.subr.bf16.mxu0 0
        %419 = vmatpush1.bf16.xpose.msra.mxu0 %v401
        %420 = vmatprep.subr.bf16.mxu0 0
        %421 = vmatpush1.bf16.xpose.msra.mxu0 %v398
        %422 = vmatprep.subr.bf16.mxu0 0
        %423 = vmatpush1.bf16.xpose.msra.mxu0 %v395
        %424 = vmatprep.subr.bf16.mxu0 0
        %425 = vmatpush1.bf16.xpose.msra.mxu0 %v392
        %426 = vmatprep.subr.bf16.mxu0 0
        %427 = vmatpush1.bf16.xpose.msra.mxu0 %v389
        %428 = vmatprep.subr.bf16.mxu0 0
        %429 = vmatpush2.bf16.xpose.msra.mxu0 0
        %430 = vmatprep.subr.bf16.mxu0 0
        %431 = vmatpush2.bf16.xpose.msra.mxu0 0
        %432 = vmatprep.subr.bf16.mxu0 0
        %433 = vmatpush2.bf16.xpose.msra.mxu0 0
        %434 = vmatprep.subr.bf16.mxu0 0
        %435 = vmatpush2.bf16.xpose.msra.mxu0 0
        %436 = vmatprep.subr.bf16.mxu0 0
        %437 = vmatpush2.bf16.xpose.msra.mxu0 0
        %438 = vmatprep.subr.bf16.mxu0 0
        %439 = vmatpush2.bf16.xpose.msra.mxu0 0
        %440 = vmatprep.subr.bf16.mxu0 0
        %441 = vmatpush2.bf16.xpose.msra.mxu0 0
        %442 = vmatprep.subr.bf16.mxu0 0
        %443 = vmatpush2.bf16.xpose.msra.mxu0 0
        %444 = vmatprep.mubr.bf16.mxu0 0
        %445 = vmatmul.mubr.bf16.gmra.mxu0 %v365
        %v446 = vpop.f32.mrf.mxu0
        %v447 = vadd.f32 0.0, %v446
        %v448 = vpop.f32.mrf.mxu0
        %v449 = vpop.f32.mrf.mxu0
        %v450 = vadd.f32 0.0, %v449
        %v451 = vpop.f32.mrf.mxu0
        %452 = vmatprep.mubr.bf16.mxu0 0
        %453 = vmatmul.mubr.bf16.gmra.mxu0 %v368
        %v454 = vpop.f32.mrf.mxu0
        %v455 = vadd.f32 0.0, %v454
        %v456 = vpop.f32.mrf.mxu0
        %v457 = vpop.f32.mrf.mxu0
        %v458 = vadd.f32 0.0, %v457
        %v459 = vpop.f32.mrf.mxu0
        %460 = vmatprep.mubr.bf16.mxu0 0
        %461 = vmatmul.mubr.bf16.gmra.mxu0 %v371
        %v462 = vpop.f32.mrf.mxu0
        %v463 = vadd.f32 0.0, %v462
        %v464 = vpop.f32.mrf.mxu0
        %v465 = vpop.f32.mrf.mxu0
        %v466 = vadd.f32 0.0, %v465
        %v467 = vpop.f32.mrf.mxu0
        %468 = vmatprep.mubr.bf16.mxu0 0
        %469 = vmatmul.mubr.bf16.gmra.mxu0 %v374
        %v470 = vpop.f32.mrf.mxu0
        %v471 = vadd.f32 0.0, %v470
        %v472 = vpop.f32.mrf.mxu0
        %v473 = vpop.f32.mrf.mxu0
        %v474 = vadd.f32 0.0, %v473
        %v475 = vpop.f32.mrf.mxu0
        %476 = vmatprep.mubr.bf16.mxu0 0
        %477 = vmatmul.mubr.bf16.gmra.mxu0 %v377
        %v478 = vpop.f32.mrf.mxu0
        %v479 = vadd.f32 0.0, %v478
        %v480 = vpop.f32.mrf.mxu0
        %v481 = vpop.f32.mrf.mxu0
        %v482 = vadd.f32 0.0, %v481
        %v483 = vpop.f32.mrf.mxu0
        %484 = vmatprep.mubr.bf16.mxu0 0
        %485 = vmatmul.mubr.bf16.gmra.mxu0 %v380
        %v486 = vpop.f32.mrf.mxu0
        %v487 = vadd.f32 0.0, %v486
        %v488 = vpop.f32.mrf.mxu0
        %v489 = vpop.f32.mrf.mxu0
        %v490 = vadd.f32 0.0, %v489
        %v491 = vpop.f32.mrf.mxu0
        %492 = vmatprep.mubr.bf16.mxu0 0
        %493 = vmatmul.mubr.bf16.gmra.mxu0 %v383
        %v494 = vpop.f32.mrf.mxu0
        %v495 = vadd.f32 0.0, %v494
        %v496 = vpop.f32.mrf.mxu0
        %v497 = vpop.f32.mrf.mxu0
        %v498 = vadd.f32 0.0, %v497
        %v499 = vpop.f32.mrf.mxu0
        %500 = vmatprep.mubr.bf16.mxu0 0
        %501 = vmatmul.mubr.bf16.gmra.mxu0 %v386
        %v502 = vpop.f32.mrf.mxu0
        %v503 = vadd.f32 0.0, %v502
        %v504 = vpop.f32.mrf.mxu0
        %v505 = vpop.f32.mrf.mxu0
        %v506 = vadd.f32 0.0, %v505
        %v507 = vpop.f32.mrf.mxu0
        %508 = vdwg.mxu0
        %v509 = vxor.u32 %v447, 2147483648
        %v510 = vxor.u32 %v450, 2147483648
        %v511 = vxor.u32 %v455, 2147483648
        %v512 = vxor.u32 %v458, 2147483648
        %v513 = vxor.u32 %v463, 2147483648
        %v514 = vxor.u32 %v466, 2147483648
        %v515 = vxor.u32 %v471, 2147483648
        %v516 = vxor.u32 %v474, 2147483648
        %v517 = vxor.u32 %v479, 2147483648
        %v518 = vxor.u32 %v482, 2147483648
        %v519 = vxor.u32 %v487, 2147483648
        %v520 = vxor.u32 %v490, 2147483648
        %v521 = vxor.u32 %v495, 2147483648
        %v522 = vxor.u32 %v498, 2147483648
        %v523 = vxor.u32 %v503, 2147483648
        %v524 = vxor.u32 %v506, 2147483648
        %v525 = vmul.f32 %v509, 1.442695
        %v526 = vpow.pop %v525
        %v527 = vmul.f32 %v510, 1.442695
        %v528 = vpow.pop %v527
        %v529 = vmul.f32 %v511, 1.442695
        %v530 = vpow.pop %v529
        %v531 = vmul.f32 %v512, 1.442695
        %v532 = vpow.pop %v531
        %v533 = vmul.f32 %v513, 1.442695
        %v534 = vpow.pop %v533
        %v535 = vmul.f32 %v514, 1.442695
        %v536 = vpow.pop %v535
        %v537 = vmul.f32 %v515, 1.442695
        %v538 = vpow.pop %v537
        %v539 = vmul.f32 %v516, 1.442695
        %v540 = vpow.pop %v539
        %v541 = vmul.f32 %v517, 1.442695
        %v542 = vpow.pop %v541
        %v543 = vmul.f32 %v518, 1.442695
        %v544 = vpow.pop %v543
        %v545 = vmul.f32 %v519, 1.442695
        %v546 = vpow.pop %v545
        %v547 = vmul.f32 %v520, 1.442695
        %v548 = vpow.pop %v547
        %v549 = vmul.f32 %v521, 1.442695
        %v550 = vpow.pop %v549
        %v551 = vmul.f32 %v522, 1.442695
        %v552 = vpow.pop %v551
        %v553 = vmul.f32 %v523, 1.442695
        %v554 = vpow.pop %v553
        %v555 = vmul.f32 %v524, 1.442695
        %v556 = vpow.pop %v555
        %v557 = vadd.f32 %v526, 1.0
        %v558 = vadd.f32 %v528, 1.0
        %v559 = vadd.f32 %v530, 1.0
        %v560 = vadd.f32 %v532, 1.0
        %v561 = vadd.f32 %v534, 1.0
        %v562 = vadd.f32 %v536, 1.0
        %v563 = vadd.f32 %v538, 1.0
        %v564 = vadd.f32 %v540, 1.0
        %v565 = vadd.f32 %v542, 1.0
        %v566 = vadd.f32 %v544, 1.0
        %v567 = vadd.f32 %v546, 1.0
        %v568 = vadd.f32 %v548, 1.0
        %v569 = vadd.f32 %v550, 1.0
        %v570 = vadd.f32 %v552, 1.0
        %v571 = vadd.f32 %v554, 1.0
        %v572 = vadd.f32 %v556, 1.0
        %v573 = vrcp.pop %v557
        %v574 = vmul.f32 1.0, %v573
        %v575 = vrcp.pop %v558
        %v576 = vmul.f32 1.0, %v575
        %v577 = vrcp.pop %v559
        %v578 = vmul.f32 1.0, %v577
        %v579 = vrcp.pop %v560
        %v580 = vmul.f32 1.0, %v579
        %v581 = vrcp.pop %v561
        %v582 = vmul.f32 1.0, %v581
        %v583 = vrcp.pop %v562
        %v584 = vmul.f32 1.0, %v583
        %v585 = vrcp.pop %v563
        %v586 = vmul.f32 1.0, %v585
        %v587 = vrcp.pop %v564
        %v588 = vmul.f32 1.0, %v587
        %v589 = vrcp.pop %v565
        %v590 = vmul.f32 1.0, %v589
        %v591 = vrcp.pop %v566
        %v592 = vmul.f32 1.0, %v591
        %v593 = vrcp.pop %v567
        %v594 = vmul.f32 1.0, %v593
        %v595 = vrcp.pop %v568
        %v596 = vmul.f32 1.0, %v595
        %v597 = vrcp.pop %v569
        %v598 = vmul.f32 1.0, %v597
        %v599 = vrcp.pop %v570
        %v600 = vmul.f32 1.0, %v599
        %v601 = vrcp.pop %v571
        %v602 = vmul.f32 1.0, %v601
        %v603 = vrcp.pop %v572
        %v604 = vmul.f32 1.0, %v603
        %v605 = vmul.f32 %v447, %v574
        %v606 = vmul.f32 %v450, %v576
        %v607 = vmul.f32 %v455, %v578
        %v608 = vmul.f32 %v458, %v580
        %v609 = vmul.f32 %v463, %v582
        %v610 = vmul.f32 %v466, %v584
        %v611 = vmul.f32 %v471, %v586
        %v612 = vmul.f32 %v474, %v588
        %v613 = vmul.f32 %v479, %v590
        %v614 = vmul.f32 %v482, %v592
        %v615 = vmul.f32 %v487, %v594
        %v616 = vmul.f32 %v490, %v596
        %v617 = vmul.f32 %v495, %v598
        %v618 = vmul.f32 %v498, %v600
        %v619 = vmul.f32 %v503, %v602
        %v620 = vmul.f32 %v506, %v604
        %v621 = vsub.f32 %v605, 1.0
        %v622 = vsub.f32 %v606, 1.0
        %v623 = vsub.f32 %v607, 1.0
        %v624 = vsub.f32 %v608, 1.0
        %v625 = vsub.f32 %v609, 1.0
        %v626 = vsub.f32 %v610, 1.0
        %v627 = vsub.f32 %v611, 1.0
        %v628 = vsub.f32 %v612, 1.0
        %v629 = vsub.f32 %v613, 1.0
        %v630 = vsub.f32 %v614, 1.0
        %v631 = vsub.f32 %v615, 1.0
        %v632 = vsub.f32 %v616, 1.0
        %v633 = vsub.f32 %v617, 1.0
        %v634 = vsub.f32 %v618, 1.0
        %v635 = vsub.f32 %v619, 1.0
        %v636 = vsub.f32 %v620, 1.0
        %v637 = vstv %s250
        %v638 = vmul.f32 %v621, %v637
        %v639 = vmul.f32 %v622, %v637
        %v640 = vmul.f32 %v623, %v637
        %v641 = vmul.f32 %v624, %v637
        %v642 = vmul.f32 %v625, %v637
        %v643 = vmul.f32 %v626, %v637
        %v644 = vmul.f32 %v627, %v637
        %v645 = vmul.f32 %v628, %v637
        %v646 = vmul.f32 %v629, %v637
        %v647 = vmul.f32 %v630, %v637
        %v648 = vmul.f32 %v631, %v637
        %v649 = vmul.f32 %v632, %v637
        %v650 = vmul.f32 %v633, %v637
        %v651 = vmul.f32 %v634, %v637
        %v652 = vmul.f32 %v635, %v637
        %v653 = vmul.f32 %v636, %v637
        %v654 = vmul.f32 %v638, 1.442695
        %v655 = vpow.pop %v654
        %v656 = vmul.f32 %v639, 1.442695
        %v657 = vpow.pop %v656
        %v658 = vmul.f32 %v640, 1.442695
        %v659 = vpow.pop %v658
        %v660 = vmul.f32 %v641, 1.442695
        %v661 = vpow.pop %v660
        %v662 = vmul.f32 %v642, 1.442695
        %v663 = vpow.pop %v662
        %v664 = vmul.f32 %v643, 1.442695
        %v665 = vpow.pop %v664
        %v666 = vmul.f32 %v644, 1.442695
        %v667 = vpow.pop %v666
        %v668 = vmul.f32 %v645, 1.442695
        %v669 = vpow.pop %v668
        %v670 = vmul.f32 %v646, 1.442695
        %v671 = vpow.pop %v670
        %v672 = vmul.f32 %v647, 1.442695
        %v673 = vpow.pop %v672
        %v674 = vmul.f32 %v648, 1.442695
        %v675 = vpow.pop %v674
        %v676 = vmul.f32 %v649, 1.442695
        %v677 = vpow.pop %v676
        %v678 = vmul.f32 %v650, 1.442695
        %v679 = vpow.pop %v678
        %v680 = vmul.f32 %v651, 1.442695
        %v681 = vpow.pop %v680
        %v682 = vmul.f32 %v652, 1.442695
        %v683 = vpow.pop %v682
        %v684 = vmul.f32 %v653, 1.442695
        %v685 = vpow.pop %v684
        %v686 = vadd.f32 %v655, %v657
        %v687 = vadd.f32 %v686, %v659
        %v688 = vadd.f32 %v687, %v661
        %v689 = vadd.f32 %v688, %v663
        %v690 = vadd.f32 %v689, %v665
        %v691 = vadd.f32 %v690, %v667
        %v692 = vadd.f32 %v691, %v669
        %v693 = vadd.f32 %v692, %v671
        %v694 = vadd.f32 %v693, %v673
        %v695 = vadd.f32 %v694, %v675
        %v696 = vadd.f32 %v695, %v677
        %v697 = vadd.f32 %v696, %v679
        %v698 = vadd.f32 %v697, %v681
        %v699 = vadd.f32 %v698, %v683
        %v700 = vadd.f32 %v699, %v685
        %701 = vst [vmem:[%s230] sm:$0xff] %v700
        %p702 = scmp.eq.s32.totalorder %s25, 0
        // Predicated region
        $region33: #{tpu_custom_call.1} parent=31 // pred_check
          %p703 = pneg %p702
        $region34: #{tpu_custom_call.1} parent=31 // pred_check_branch
          %705 = sbr.rel (%p703) target = $region36
        $region35: #{tpu_custom_call.1} parent=31 // pred_region
          %706 = vst [vmem:[#allocation2] sm:$0xff] 0.0
          %707 = vst [vmem:[#allocation2 + $0x8] sm:$0xff] 0.0
          %708 = vst [vmem:[#allocation2 + $0x10] sm:$0xff] 0.0
          %709 = vst [vmem:[#allocation2 + $0x18] sm:$0xff] 0.0
          %710 = vst [vmem:[#allocation2 + $0x20] sm:$0xff] 0.0
          %711 = vst [vmem:[#allocation2 + $0x28] sm:$0xff] 0.0
          %712 = vst [vmem:[#allocation2 + $0x30] sm:$0xff] 0.0
          %713 = vst [vmem:[#allocation2 + $0x38] sm:$0xff] 0.0
          %714 = vst [vmem:[#allocation2 + $0x40] sm:$0xff] 0.0
          %715 = vst [vmem:[#allocation2 + $0x48] sm:$0xff] 0.0
          %716 = vst [vmem:[#allocation2 + $0x50] sm:$0xff] 0.0
          %717 = vst [vmem:[#allocation2 + $0x58] sm:$0xff] 0.0
          %718 = vst [vmem:[#allocation2 + $0x60] sm:$0xff] 0.0
          %719 = vst [vmem:[#allocation2 + $0x68] sm:$0xff] 0.0
          %720 = vst [vmem:[#allocation2 + $0x70] sm:$0xff] 0.0
          %721 = vst [vmem:[#allocation2 + $0x78] sm:$0xff] 0.0
        $region36: #{tpu_custom_call.1} parent=31 // pred_fallthru
          _
        %v722 = vld [vmem:[#allocation2] sm:$0xff]
        %v723 = vld [vmem:[#allocation2 + $0x8] sm:$0xff]
        %v724 = vld [vmem:[#allocation2 + $0x10] sm:$0xff]
        %v725 = vld [vmem:[#allocation2 + $0x18] sm:$0xff]
        %v726 = vld [vmem:[#allocation2 + $0x20] sm:$0xff]
        %v727 = vld [vmem:[#allocation2 + $0x28] sm:$0xff]
        %v728 = vld [vmem:[#allocation2 + $0x30] sm:$0xff]
        %v729 = vld [vmem:[#allocation2 + $0x38] sm:$0xff]
        %v730 = vld [vmem:[#allocation2 + $0x40] sm:$0xff]
        %v731 = vld [vmem:[#allocation2 + $0x48] sm:$0xff]
        %v732 = vld [vmem:[#allocation2 + $0x50] sm:$0xff]
        %v733 = vld [vmem:[#allocation2 + $0x58] sm:$0xff]
        %v734 = vld [vmem:[#allocation2 + $0x60] sm:$0xff]
        %v735 = vld [vmem:[#allocation2 + $0x68] sm:$0xff]
        %v736 = vld [vmem:[#allocation2 + $0x70] sm:$0xff]
        %v737 = vld [vmem:[#allocation2 + $0x78] sm:$0xff]
        %v738 = vadd.f32 %v722, %v655
        %v739 = vadd.f32 %v723, %v657
        %v740 = vadd.f32 %v724, %v659
        %v741 = vadd.f32 %v725, %v661
        %v742 = vadd.f32 %v726, %v663
        %v743 = vadd.f32 %v727, %v665
        %v744 = vadd.f32 %v728, %v667
        %v745 = vadd.f32 %v729, %v669
        %v746 = vadd.f32 %v730, %v671
        %v747 = vadd.f32 %v731, %v673
        %v748 = vadd.f32 %v732, %v675
        %v749 = vadd.f32 %v733, %v677
        %v750 = vadd.f32 %v734, %v679
        %v751 = vadd.f32 %v735, %v681
        %v752 = vadd.f32 %v736, %v683
        %v753 = vadd.f32 %v737, %v685
        %754 = vst [vmem:[#allocation2] sm:$0xff] %v738
        %755 = vst [vmem:[#allocation2 + $0x8] sm:$0xff] %v739
        %756 = vst [vmem:[#allocation2 + $0x10] sm:$0xff] %v740
        %757 = vst [vmem:[#allocation2 + $0x18] sm:$0xff] %v741
        %758 = vst [vmem:[#allocation2 + $0x20] sm:$0xff] %v742
        %759 = vst [vmem:[#allocation2 + $0x28] sm:$0xff] %v743
        %760 = vst [vmem:[#allocation2 + $0x30] sm:$0xff] %v744
        %761 = vst [vmem:[#allocation2 + $0x38] sm:$0xff] %v745
        %762 = vst [vmem:[#allocation2 + $0x40] sm:$0xff] %v746
        %763 = vst [vmem:[#allocation2 + $0x48] sm:$0xff] %v747
        %764 = vst [vmem:[#allocation2 + $0x50] sm:$0xff] %v748
        %765 = vst [vmem:[#allocation2 + $0x58] sm:$0xff] %v749
        %766 = vst [vmem:[#allocation2 + $0x60] sm:$0xff] %v750
        %767 = vst [vmem:[#allocation2 + $0x68] sm:$0xff] %v751
        %768 = vst [vmem:[#allocation2 + $0x70] sm:$0xff] %v752
        %769 = vst [vmem:[#allocation2 + $0x78] sm:$0xff] %v753
        %p770 = scmp.eq.s32.totalorder %s25, 1
        // Predicated region
        $region37: #{tpu_custom_call.1} parent=31 // pred_check
          %p771 = pneg %p770
        $region38: #{tpu_custom_call.1} parent=31 // pred_check_branch
          %773 = sbr.rel (%p771) target = $region40
        $region39: #{tpu_custom_call.1} parent=31 // pred_region
          %v774 = vld [vmem:[#allocation2] sm:$0xff]
          %v775 = vld [vmem:[#allocation2 + $0x8] sm:$0xff]
          %v776 = vld [vmem:[#allocation2 + $0x10] sm:$0xff]
          %v777 = vld [vmem:[#allocation2 + $0x18] sm:$0xff]
          %v778 = vld [vmem:[#allocation2 + $0x20] sm:$0xff]
          %v779 = vld [vmem:[#allocation2 + $0x28] sm:$0xff]
          %v780 = vld [vmem:[#allocation2 + $0x30] sm:$0xff]
          %v781 = vld [vmem:[#allocation2 + $0x38] sm:$0xff]
          %v782 = vld [vmem:[#allocation2 + $0x40] sm:$0xff]
          %v783 = vld [vmem:[#allocation2 + $0x48] sm:$0xff]
          %v784 = vld [vmem:[#allocation2 + $0x50] sm:$0xff]
          %v785 = vld [vmem:[#allocation2 + $0x58] sm:$0xff]
          %v786 = vld [vmem:[#allocation2 + $0x60] sm:$0xff]
          %v787 = vld [vmem:[#allocation2 + $0x68] sm:$0xff]
          %v788 = vld [vmem:[#allocation2 + $0x70] sm:$0xff]
          %v789 = vld [vmem:[#allocation2 + $0x78] sm:$0xff]
          %790 = vadd.xlane.f32.xlu0 %v774
          %v791 = vpop.xlane.xlu0 %790
          %792 = vadd.xlane.f32.xlu0 %v775
          %v793 = vpop.xlane.xlu0 %792
          %794 = vadd.xlane.f32.xlu0 %v776
          %v795 = vpop.xlane.xlu0 %794
          %796 = vadd.xlane.f32.xlu0 %v777
          %v797 = vpop.xlane.xlu0 %796
          %798 = vadd.xlane.f32.xlu0 %v778
          %v799 = vpop.xlane.xlu0 %798
          %800 = vadd.xlane.f32.xlu0 %v779
          %v801 = vpop.xlane.xlu0 %800
          %802 = vadd.xlane.f32.xlu0 %v780
          %v803 = vpop.xlane.xlu0 %802
          %804 = vadd.xlane.f32.xlu0 %v781
          %v805 = vpop.xlane.xlu0 %804
          %806 = vadd.xlane.f32.xlu0 %v782
          %v807 = vpop.xlane.xlu0 %806
          %808 = vadd.xlane.f32.xlu0 %v783
          %v809 = vpop.xlane.xlu0 %808
          %810 = vadd.xlane.f32.xlu0 %v784
          %v811 = vpop.xlane.xlu0 %810
          %812 = vadd.xlane.f32.xlu0 %v785
          %v813 = vpop.xlane.xlu0 %812
          %814 = vadd.xlane.f32.xlu0 %v786
          %v815 = vpop.xlane.xlu0 %814
          %816 = vadd.xlane.f32.xlu0 %v787
          %v817 = vpop.xlane.xlu0 %816
          %818 = vadd.xlane.f32.xlu0 %v788
          %v819 = vpop.xlane.xlu0 %818
          %820 = vadd.xlane.f32.xlu0 %v789
          %v821 = vpop.xlane.xlu0 %820
          %v822 = vmax.f32 %v791, 1e-37
          %v823 = vmax.f32 %v793, 1e-37
          %v824 = vmax.f32 %v795, 1e-37
          %v825 = vmax.f32 %v797, 1e-37
          %v826 = vmax.f32 %v799, 1e-37
          %v827 = vmax.f32 %v801, 1e-37
          %v828 = vmax.f32 %v803, 1e-37
          %v829 = vmax.f32 %v805, 1e-37
          %v830 = vmax.f32 %v807, 1e-37
          %v831 = vmax.f32 %v809, 1e-37
          %v832 = vmax.f32 %v811, 1e-37
          %v833 = vmax.f32 %v813, 1e-37
          %v834 = vmax.f32 %v815, 1e-37
          %v835 = vmax.f32 %v817, 1e-37
          %v836 = vmax.f32 %v819, 1e-37
          %v837 = vmax.f32 %v821, 1e-37
          %v838 = vlog2.pop %v822
          %v839 = vmul.f32 %v838, 0.6931472
          %v840 = vlog2.pop %v823
          %v841 = vmul.f32 %v840, 0.6931472
          %v842 = vlog2.pop %v824
          %v843 = vmul.f32 %v842, 0.6931472
          %v844 = vlog2.pop %v825
          %v845 = vmul.f32 %v844, 0.6931472
          %v846 = vlog2.pop %v826
          %v847 = vmul.f32 %v846, 0.6931472
          %v848 = vlog2.pop %v827
          %v849 = vmul.f32 %v848, 0.6931472
          %v850 = vlog2.pop %v828
          %v851 = vmul.f32 %v850, 0.6931472
          %v852 = vlog2.pop %v829
          %v853 = vmul.f32 %v852, 0.6931472
          %v854 = vlog2.pop %v830
          %v855 = vmul.f32 %v854, 0.6931472
          %v856 = vlog2.pop %v831
          %v857 = vmul.f32 %v856, 0.6931472
          %v858 = vlog2.pop %v832
          %v859 = vmul.f32 %v858, 0.6931472
          %v860 = vlog2.pop %v833
          %v861 = vmul.f32 %v860, 0.6931472
          %v862 = vlog2.pop %v834
          %v863 = vmul.f32 %v862, 0.6931472
          %v864 = vlog2.pop %v835
          %v865 = vmul.f32 %v864, 0.6931472
          %v866 = vlog2.pop %v836
          %v867 = vmul.f32 %v866, 0.6931472
          %v868 = vlog2.pop %v837
          %v869 = vmul.f32 %v868, 0.6931472
          %v870 = vadd.f32 %v637, %v839
          %v871 = vadd.f32 %v637, %v841
          %v872 = vadd.f32 %v637, %v843
          %v873 = vadd.f32 %v637, %v845
          %v874 = vadd.f32 %v637, %v847
          %v875 = vadd.f32 %v637, %v849
          %v876 = vadd.f32 %v637, %v851
          %v877 = vadd.f32 %v637, %v853
          %v878 = vadd.f32 %v637, %v855
          %v879 = vadd.f32 %v637, %v857
          %v880 = vadd.f32 %v637, %v859
          %v881 = vadd.f32 %v637, %v861
          %v882 = vadd.f32 %v637, %v863
          %v883 = vadd.f32 %v637, %v865
          %v884 = vadd.f32 %v637, %v867
          %v885 = vadd.f32 %v637, %v869
          %vm886 = vcmask 7168
          %887 = vst.msk [vmem:[%s247] sm:$0xff] %vm886, %v870
          %888 = vst.msk [vmem:[%s247 + $0x8] sm:$0xff] %vm886, %v871
          %889 = vst.msk [vmem:[%s247 + $0x10] sm:$0xff] %vm886, %v872
          %890 = vst.msk [vmem:[%s247 + $0x18] sm:$0xff] %vm886, %v873
          %891 = vst.msk [vmem:[%s247 + $0x20] sm:$0xff] %vm886, %v874
          %892 = vst.msk [vmem:[%s247 + $0x28] sm:$0xff] %vm886, %v875
          %893 = vst.msk [vmem:[%s247 + $0x30] sm:$0xff] %vm886, %v876
          %894 = vst.msk [vmem:[%s247 + $0x38] sm:$0xff] %vm886, %v877
          %895 = vst.msk [vmem:[%s247 + $0x40] sm:$0xff] %vm886, %v878
          %896 = vst.msk [vmem:[%s247 + $0x48] sm:$0xff] %vm886, %v879
          %897 = vst.msk [vmem:[%s247 + $0x50] sm:$0xff] %vm886, %v880
          %898 = vst.msk [vmem:[%s247 + $0x58] sm:$0xff] %vm886, %v881
          %899 = vst.msk [vmem:[%s247 + $0x60] sm:$0xff] %vm886, %v882
          %900 = vst.msk [vmem:[%s247 + $0x68] sm:$0xff] %vm886, %v883
          %901 = vst.msk [vmem:[%s247 + $0x70] sm:$0xff] %vm886, %v884
          %902 = vst.msk [vmem:[%s247 + $0x78] sm:$0xff] %vm886, %v885
        $region40: #{tpu_custom_call.1} parent=31 // pred_fallthru
          _
        %s903 = smul.u32 16, %s24
        %p904 = scmp.lt.s32.totalorder %s903, 31
        %s905 = scalar_select %p904, %s903, 31
        %s906 = smul.addr %s905, 8
        %s907 = scalar_lea.vmem %s3, %s906
        %s908 = sand.u32 %s141, 1
        %s909 = scalar_lea.sflag [#allocation5], %s908
        %s910 = sand.u32 %s141, 1
        %s911 = smul.addr %s910, 8
        %s912 = scalar_lea.vmem [#allocation4], %s911
        // Predicated region
        $region41: #{tpu_custom_call.1} parent=31 // pred_check
          %p913 = pneg %p123
        $region42: #{tpu_custom_call.1} parent=31 // pred_check_branch
          %915 = sbr.rel (%p913) target = $region44
        $region43: #{tpu_custom_call.1} parent=31 // pred_region
          %s916 = smul.u32 16, %s24
        $region44: #{tpu_custom_call.1} parent=31 // pred_fallthru
          _
        // Predicated region
        $region45: #{tpu_custom_call.1} parent=31 // pred_check
          %p917 = pneg %p151
        $region46: #{tpu_custom_call.1} parent=31 // pred_check_branch
          %919 = sbr.rel (%p917) target = $region48
        $region47: #{tpu_custom_call.1} parent=31 // pred_region
          %s921 = ssub.s32 128, 128
          %922 = vsyncadd %s909, %s921
          %s923 = smul.addr %s24, 2
          %s924 = sadd.s32 %s25, %s923
          %s925 = smul.addr %s924, 128
          %s926 = scalar_lea.hbm %s4, %s925
          %s928 = sshll.u32 %s912, 4
          %s929 = int_to_ptr.vmem [resolvable:$true] %s928
          %931 = dma.vmem_to_hbm [thread:$0]  %s929, 128, %s926, %s909
        $region48: #{tpu_custom_call.1} parent=31 // pred_fallthru
          _
      $region32: #{tpu_custom_call.1} parent=5 // pred_fallthru
        _
      %p932 = scmp.le.s32.totalorder 2, %s15
      // Predicated region
      $region49: #{tpu_custom_call.1} parent=5 // pred_check
        %p933 = pneg %p932
      $region50: #{tpu_custom_call.1} parent=5 // pred_check_branch
        %935 = sbr.rel (%p933) target = $region52
      $region51: #{tpu_custom_call.1} parent=5 // pred_region
        %s936 = ssub.s32 %s15, 2
        // Predicated region
        $region53: #{tpu_custom_call.1} parent=51 // pred_check
          %p937 = pneg %p129
        $region54: #{tpu_custom_call.1} parent=51 // pred_check_branch
          %939 = sbr.rel (%p937) target = $region56
        $region55: #{tpu_custom_call.1} parent=51 // pred_region
          %s940 = smul.u32 16, %s26
          %p941 = scmp.lt.s32.totalorder %s940, 31
          %s942 = scalar_select %p941, %s940, 31
          %s943 = smul.addr %s942, 8
          %s944 = scalar_lea.vmem %s3, %s943
        $region56: #{tpu_custom_call.1} parent=51 // pred_fallthru
          _
        // Predicated region
        $region57: #{tpu_custom_call.1} parent=51 // pred_check
          %p945 = pneg %p157
        $region58: #{tpu_custom_call.1} parent=51 // pred_check_branch
          %947 = sbr.rel (%p945) target = $region60
        $region59: #{tpu_custom_call.1} parent=51 // pred_region
          %s948 = sand.u32 %s142, 1
          %s949 = scalar_lea.sflag [#allocation5], %s948
          %s950 = sand.u32 %s142, 1
          %s951 = smul.addr %s950, 8
          %s952 = scalar_lea.vmem [#allocation4], %s951
          %953 = dma.done %s949, 128
        $region60: #{tpu_custom_call.1} parent=51 // pred_fallthru
          _
      $region52: #{tpu_custom_call.1} parent=5 // pred_fallthru
        _
    $region6: #{tpu_custom_call.1} parent=1 // loop_footer
      %s19 = sadd.s32 1, %s15
    $region7: #{tpu_custom_call.1} parent=1 // loop_footer_branch
      %14 = sbr.rel target = $region3
    $region8: #{tpu_custom_call.1} parent=1 // loop_exit
      _
    %954 = vsyncpa [#allocation5], 1
    %s955 = scalar_lea.sflag [#allocation5], 1
    %956 = vsyncpa %s955, 1

</llo_original>
